<compile_context>
chip_gen: v7x
topology: tpu7x:2x2x1
jax: 0.10.0
libtpu: 0.0.40
codegen_flags: <defaults>
</compile_context>

<pallas_src>
import functools

import jax
import jax.numpy as jnp
from jax.experimental import pallas as pl
from jax.experimental.pallas import tpu as pltpu


def _round_up(x, m):
    return ((x + m - 1) // m) * m


def linear_kernel(x_ref, w_ref, b_ref, o_ref, acc_ref):
    # x_ref  : (tm, tk)  bf16 activation tile
    # w_ref  : (tk, tn)  bf16 weight tile (wrapper pre-transposed to in x out)
    # b_ref  : (1,  tn)  f32 bias tile
    # o_ref  : (tm, tn)  f32 output tile
    # acc_ref: (tm, tn)  f32 accumulator scratch, carried across the K grid axis
    k = pl.program_id(2)

    @pl.when(k == 0)
    def _():
        acc_ref[...] = jnp.zeros_like(acc_ref)

    # bf16 MXU inputs (cast once in the wrapper), f32 accumulation, NN contraction
    # (no per-tile transpose: weight is already (in, out)).
    acc_ref[...] += jnp.dot(x_ref[...], w_ref[...],
                            preferred_element_type=jnp.float32)

    @pl.when(k == pl.num_programs(2) - 1)
    def _():
        o_ref[...] = (acc_ref[...] + b_ref[...]).astype(o_ref.dtype)


def _pick_tiles_and_vmem():
    """Generation-aware (tm, tn, tk, vmem_limit_bytes) defaults."""
    try:
        kind = jax.devices()[0].device_kind.lower()
    except Exception:  # pragma: no cover - defensive
        kind = ""
    if "v6" in kind:
        # v6e: highest roofline knee; big tiles, raise scoped VMEM (physical 128 MiB).
        return 1024, 2048, 1024, 100 * 1024 * 1024
    if "v5" in kind:
        # v5e: 512x1024 clears the ~240 FLOPs/byte knee; long K cuts acc RMW per FLOP.
        return 512, 1024, 1024, 64 * 1024 * 1024
    # v7x / unknown: 1024x1024 is already compute-bound; ~16 MiB of buffers fits
    # comfortably under the 32 MiB scoped default / 64 MiB physical VMEM.
    return 1024, 1024, 512, 32 * 1024 * 1024


@functools.partial(jax.jit, static_argnames=("tm", "tn", "tk", "vmem_limit"))
def _linear_2d(x, weight, bias, *, tm, tn, tk, vmem_limit):
    B, in_f = x.shape
    out_f, in_f2 = weight.shape
    assert in_f == in_f2

    # Clamp tiles to the (aligned) problem size: lane dims 128-multiples,
    # tm a 16-multiple (bf16 packs two rows per sublane).
    tm = min(tm, _round_up(B, 16))
    tn = min(tn, _round_up(out_f, 128))
    tk = min(tk, _round_up(in_f, 128))

    M = _round_up(B, tm)
    N = _round_up(out_f, tn)
    K = _round_up(in_f, tk)

    # Megacore (v7x): if there is only one M tile, keep >= 2 N tiles when the
    # shape allows it so both TensorCores get 'parallel' work.
    if M // tm == 1 and N // tn == 1 and tn >= 256 and tn % 256 == 0 \
            and _round_up(out_f, 128) > tn // 2:
        tn //= 2
        N = _round_up(out_f, tn)

    # One-time wrapper-side prep: bf16 cast + weight transpose to (K, N);
    # zero-pad ragged shapes to tile multiples (zeros add nothing to the dot).
    x_bf = x.astype(jnp.bfloat16)
    w_bf = weight.astype(jnp.bfloat16).T  # (in_f, out_f)
    x_p = x_bf if (M == B and K == in_f) else jnp.pad(
        x_bf, ((0, M - B), (0, K - in_f)))
    w_p = w_bf if (K == in_f and N == out_f) else jnp.pad(
        w_bf, ((0, K - in_f), (0, N - out_f)))
    b_p = bias if N == out_f else jnp.pad(bias, (0, N - out_f))
    b2d = b_p.reshape(1, N).astype(jnp.float32)

    grid = (M // tm, N // tn, K // tk)

    cost = pl.CostEstimate(
        flops=2 * M * N * K,
        transcendentals=0,
        bytes_accessed=M * K * 2 + K * N * 2 + N * 4 + M * N * 4,  # bf16 in, f32 out
    )

    out = pl.pallas_call(
        linear_kernel,
        out_shape=jax.ShapeDtypeStruct((M, N), jnp.float32),
        grid_spec=pltpu.PrefetchScalarGridSpec(
            num_scalar_prefetch=0,
            grid=grid,
            in_specs=[
                pl.BlockSpec((tm, tk), lambda i, j, k: (i, k)),   # x tile
                pl.BlockSpec((tk, tn), lambda i, j, k: (k, j)),   # weight tile (in x out)
                pl.BlockSpec((1, tn), lambda i, j, k: (0, j)),    # bias tile
            ],
            out_specs=pl.BlockSpec((tm, tn), lambda i, j, k: (i, j)),
            scratch_shapes=[pltpu.VMEM((tm, tn), jnp.float32)],
        ),
        compiler_params=pltpu.CompilerParams(
            dimension_semantics=("parallel", "parallel", "arbitrary"),
            vmem_limit_bytes=vmem_limit,
        ),
        cost_estimate=cost,
    )(x_p, w_p, b2d)

    return out[:B, :out_f]


def linear_forward(x, weight, bias, *, tm=None, tn=None, tk=None):
    """y = x @ weight.T + bias  (PyTorch nn.Linear semantics, any leading dims).

    x:      (..., in_features)         float32
    weight: (out_features, in_features) float32 (PyTorch layout, NOT transposed)
    bias:   (out_features,)             float32
    returns (..., out_features)         float32
    """
    d_tm, d_tn, d_tk, vmem_limit = _pick_tiles_and_vmem()
    tm = d_tm if tm is None else tm
    tn = d_tn if tn is None else tn
    tk = d_tk if tk is None else tk

    lead = x.shape[:-1]
    x2 = x.reshape(-1, x.shape[-1])
    y2 = _linear_2d(x2, weight, bias, tm=tm, tn=tn, tk=tk, vmem_limit=vmem_limit)
    return y2.reshape(*lead, weight.shape[0])


if __name__ == "__main__":
    # Small shapes implied by nn.Linear(in_features, out_features).
    batch, in_features, out_features = 8, 32, 16

    key = jax.random.PRNGKey(0)
    kx, kw, kb = jax.random.split(key, 3)

    x = jax.random.normal(kx, (batch, in_features), dtype=jnp.float32)
    # Deterministic param init mimicking nn.Linear's uniform(-1/sqrt(in), 1/sqrt(in)).
    bound = 1.0 / (in_features ** 0.5)
    weight = jax.random.uniform(kw, (out_features, in_features),
                                minval=-bound, maxval=bound, dtype=jnp.float32)
    bias = jax.random.uniform(kb, (out_features,),
                              minval=-bound, maxval=bound, dtype=jnp.float32)

    y = linear_forward(x, weight, bias)
    jax.block_until_ready(y)

    # Reference check. The kernel uses bf16 MXU inputs with f32 accumulation,
    # so compare against the f32 reference with bf16-appropriate tolerances.
    y_ref = x @ weight.T + bias
    assert y.shape == (batch, out_features)
    assert jnp.allclose(y, y_ref, atol=2e-2, rtol=2e-2), (
        f"max abs err = {jnp.max(jnp.abs(y - y_ref))}")

    print("KERNEL_OK")
</pallas_src>

<mosaic_0001>
module attributes {stable_mosaic.version = 11 : i64} {
  func.func @linear_kernel(%arg0: i32, %arg1: i32, %arg2: i32, %arg3: memref<16x128xbf16, #tpu.memory_space<vmem>>, %arg4: memref<128x128xbf16, #tpu.memory_space<vmem>>, %arg5: memref<1x128xf32, #tpu.memory_space<vmem>>, %arg6: memref<16x128xf32, #tpu.memory_space<vmem>>, %arg7: memref<16x128xf32, #tpu.memory_space<vmem>>) attributes {dimension_semantics = [#tpu.dimension_semantics<parallel>, #tpu.dimension_semantics<parallel>, #tpu.dimension_semantics<arbitrary>], iteration_bounds = array<i64: 1, 1, 1>, scalar_prefetch = 0 : i64, scratch_operands = 1 : i64, tpu.core_type = #tpu.core_type<tc>, window_params = [{transform_indices = @transform_0, window_bounds = array<i64: 16, 128>}, {transform_indices = @transform_1, window_bounds = array<i64: 128, 128>}, {transform_indices = @transform_2, window_bounds = array<i64: 1, 128>}, {transform_indices = @transform_3, window_bounds = array<i64: 16, 128>}]} {
    %c0_i32 = arith.constant 0 : i32
    %0 = arith.cmpi eq, %arg2, %c0_i32 : i32
    %1 = arith.extui %0 : i1 to i32
    %c0_i32_0 = arith.constant 0 : i32
    %2 = arith.cmpi ne, %1, %c0_i32_0 : i32
    scf.if %2 {
      %cst_10 = arith.constant 0.000000e+00 : f32
      %12 = vector.broadcast %cst_10 : f32 to vector<16x128xf32>
      %c0_11 = arith.constant 0 : index
      %c0_12 = arith.constant 0 : index
      %13 = vector.load %arg7[%c0_11, %c0_12] : memref<16x128xf32, #tpu.memory_space<vmem>>, vector<16x128xf32>
      tpu.vector_store %arg7[%c0_11, %c0_12], %12 {strides = array<i32>} : memref<16x128xf32, #tpu.memory_space<vmem>>, vector<16x128xf32>,
    } else {
    }
    %c0 = arith.constant 0 : index
    %c0_1 = arith.constant 0 : index
    %3 = vector.load %arg7[%c0, %c0_1] : memref<16x128xf32, #tpu.memory_space<vmem>>, vector<16x128xf32>
    %c0_2 = arith.constant 0 : index
    %c0_3 = arith.constant 0 : index
    %4 = vector.load %arg3[%c0_2, %c0_3] : memref<16x128xbf16, #tpu.memory_space<vmem>>, vector<16x128xbf16>
    %c0_4 = arith.constant 0 : index
    %c0_5 = arith.constant 0 : index
    %5 = vector.load %arg4[%c0_4, %c0_5] : memref<128x128xbf16, #tpu.memory_space<vmem>>, vector<128x128xbf16>
    %cst = arith.constant dense<0.000000e+00> : vector<16x128xf32>
    %6 = tpu.matmul %4, %5, %cst {dimension_numbers = #tpu.dot_dimension_numbers<[1], [0], [0], [1], [0, 0, 1, 1], [], []>} : vector<16x128xbf16>, vector<128x128xbf16>, vector<16x128xf32> -> vector<16x128xf32>
    %7 = arith.addf %3, %6 : vector<16x128xf32>
    %c0_6 = arith.constant 0 : index
    %c0_7 = arith.constant 0 : index
    %8 = vector.load %arg7[%c0_6, %c0_7] : memref<16x128xf32, #tpu.memory_space<vmem>>, vector<16x128xf32>
    tpu.vector_store %arg7[%c0_6, %c0_7], %7 {strides = array<i32>} : memref<16x128xf32, #tpu.memory_space<vmem>>, vector<16x128xf32>,
    %c0_i32_8 = arith.constant 0 : i32
    %9 = arith.cmpi eq, %arg2, %c0_i32_8 : i32
    %10 = arith.extui %9 : i1 to i32
    %c0_i32_9 = arith.constant 0 : i32
    %11 = arith.cmpi ne, %10, %c0_i32_9 : i32
    scf.if %11 {
      %c0_10 = arith.constant 0 : index
      %c0_11 = arith.constant 0 : index
      %12 = vector.load %arg7[%c0_10, %c0_11] : memref<16x128xf32, #tpu.memory_space<vmem>>, vector<16x128xf32>
      %c0_12 = arith.constant 0 : index
      %c0_13 = arith.constant 0 : index
      %13 = vector.load %arg5[%c0_12, %c0_13] : memref<1x128xf32, #tpu.memory_space<vmem>>, vector<1x128xf32>
      %14 = vector.broadcast %13 : vector<1x128xf32> to vector<16x128xf32>
      %15 = arith.addf %12, %14 : vector<16x128xf32>
      %c0_14 = arith.constant 0 : index
      %c0_15 = arith.constant 0 : index
      %16 = vector.load %arg6[%c0_14, %c0_15] : memref<16x128xf32, #tpu.memory_space<vmem>>, vector<16x128xf32>
      tpu.vector_store %arg6[%c0_14, %c0_15], %15 {strides = array<i32>} : memref<16x128xf32, #tpu.memory_space<vmem>>, vector<16x128xf32>,
    } else {
    }
    return
  }
  func.func @transform_0(%arg0: i32, %arg1: i32, %arg2: i32) -> (i32, i32) {
    %c0_i32 = arith.constant 0 : i32
    return %arg0, %arg2 : i32, i32
  }
  func.func @transform_1(%arg0: i32, %arg1: i32, %arg2: i32) -> (i32, i32) {
    %c0_i32 = arith.constant 0 : i32
    return %arg2, %arg1 : i32, i32
  }
  func.func @transform_2(%arg0: i32, %arg1: i32, %arg2: i32) -> (i32, i32) {
    %c0_i32 = arith.constant 0 : i32
    %c0_i32_0 = arith.constant 0 : i32
    return %c0_i32, %arg1 : i32, i32
  }
  func.func @transform_3(%arg0: i32, %arg1: i32, %arg2: i32) -> (i32, i32) {
    %c0_i32 = arith.constant 0 : i32
    return %arg0, %arg1 : i32, i32
  }
}

</mosaic_0001>

<llo_original>
// kernel: _linear_2d.1
$region0: #{_linear_2d.1}
  #allocation0 [shape = 'u32[]', space=smem, size = 0x4, offset = 0x4, fixed_abs, tag = 'smem constant byte address 0x4 - core index']
  #allocation1 [shape = 'u32[144,128]{1,0:T(1,128)}', space=vmem, size = 0x12000, scoped, tag = 'internal scratch']
  #allocation2 [shape = 'f32[16,128]{1,0:T(8,128)}', space=vmem, size = 0x2000, scoped, tag = 'scratch operand']
  %s0 = inlined_call_operand.vmem [shape: bf16[16,128], index: 0, kind: input, shape index: {}]
  %s1 = inlined_call_operand.vmem [shape: bf16[128,128], index: 1, kind: input, shape index: {}]
  %s2 = inlined_call_operand.vmem [shape: f32[1,128], index: 2, kind: input, shape index: {}]
  %s3 = inlined_call_operand.vmem [shape: f32[16,128], index: 3, kind: output, shape index: {}]
  %s4 = sld [smem:[#allocation0]]
  $region30: #{_linear_2d.1} parent=0
    _
  %s6 = ssub.s32 1, %s4
  %s7 = scalar_select 0, %s6, %s4
  // Predicated region
  $region2: #{_linear_2d.1} parent=0 // pred_check
    _
  $region3: #{_linear_2d.1} parent=0 // pred_check_branch
    %9 = sbr.rel (0) target = $region5
  $region4: #{_linear_2d.1} parent=0 // pred_region
    _
  $region5: #{_linear_2d.1} parent=0 // pred_fallthru
    _
  // Predicated region
  $region6: #{_linear_2d.1} parent=0 // pred_check
    _
  $region7: #{_linear_2d.1} parent=0 // pred_check_branch
    %11 = sbr.rel (0) target = $region9
  $region8: #{_linear_2d.1} parent=0 // pred_region
    _
  $region9: #{_linear_2d.1} parent=0 // pred_fallthru
    _
  // Predicated region
  $region10: #{_linear_2d.1} parent=0 // pred_check
    _
  $region11: #{_linear_2d.1} parent=0 // pred_check_branch
    %13 = sbr.rel (0) target = $region13
  $region12: #{_linear_2d.1} parent=0 // pred_region
    _
  $region13: #{_linear_2d.1} parent=0 // pred_fallthru
    _
  %p15 = scmp.eq.s32.totalorder 0, 0
  // Predicated region
  $region14: #{_linear_2d.1} parent=0 // pred_check
    %p16 = pneg %p15
  $region15: #{_linear_2d.1} parent=0 // pred_check_branch
    %18 = sbr.rel (%p16) target = $region17
  $region16: #{_linear_2d.1} parent=0 // pred_region
    %19 = vst [vmem:[#allocation2] sm:$0xff] 0.0
    %20 = vst [vmem:[#allocation2 + $0x8] sm:$0xff] 0.0
  $region17: #{_linear_2d.1} parent=0 // pred_fallthru
    _
  %v21 = vld [vmem:[#allocation2] sm:$0xff]
  %v22 = vld [vmem:[#allocation2 + $0x8] sm:$0xff]
  %v23 = vld [vmem:[%s0] sm:$0xf]
  %v24 = vld [vmem:[%s0 + $0x4] sm:$0xf]
  %v25 = vld [vmem:[%s1] sm:$0xf]
  %v26 = vld [vmem:[%s1 + $0x4] sm:$0xf]
  %v27 = vld [vmem:[%s1 + $0x8] sm:$0xf]
  %v28 = vld [vmem:[%s1 + $0xc] sm:$0xf]
  %v29 = vld [vmem:[%s1 + $0x10] sm:$0xf]
  %v30 = vld [vmem:[%s1 + $0x14] sm:$0xf]
  %v31 = vld [vmem:[%s1 + $0x18] sm:$0xf]
  %v32 = vld [vmem:[%s1 + $0x1c] sm:$0xf]
  %v33 = vld [vmem:[%s1 + $0x20] sm:$0xf]
  %v34 = vld [vmem:[%s1 + $0x24] sm:$0xf]
  %v35 = vld [vmem:[%s1 + $0x28] sm:$0xf]
  %v36 = vld [vmem:[%s1 + $0x2c] sm:$0xf]
  %v37 = vld [vmem:[%s1 + $0x30] sm:$0xf]
  %v38 = vld [vmem:[%s1 + $0x34] sm:$0xf]
  %v39 = vld [vmem:[%s1 + $0x38] sm:$0xf]
  %v40 = vld [vmem:[%s1 + $0x3c] sm:$0xf]
  %v43 = vunpack.c.l.b16 %v23
  %v44 = vunpack.c.l.b16 %v24
  %v45 = vpack.c.b16 %v44, %v43
  %v63 = vunpack.c.l.b16 %v25
  %v64 = vunpack.c.l.b16 %v26
  %v65 = vunpack.c.l.b16 %v27
  %v66 = vunpack.c.l.b16 %v28
  %v67 = vunpack.c.l.b16 %v29
  %v68 = vunpack.c.l.b16 %v30
  %v69 = vunpack.c.l.b16 %v31
  %v70 = vunpack.c.l.b16 %v32
  %v71 = vunpack.c.l.b16 %v33
  %v72 = vunpack.c.l.b16 %v34
  %v73 = vunpack.c.l.b16 %v35
  %v74 = vunpack.c.l.b16 %v36
  %v75 = vunpack.c.l.b16 %v37
  %v76 = vunpack.c.l.b16 %v38
  %v77 = vunpack.c.l.b16 %v39
  %v78 = vunpack.c.l.b16 %v40
  %v79 = vpack.c.b16 %v64, %v63
  %v80 = vpack.c.b16 %v66, %v65
  %v81 = vpack.c.b16 %v68, %v67
  %v82 = vpack.c.b16 %v70, %v69
  %v83 = vpack.c.b16 %v72, %v71
  %v84 = vpack.c.b16 %v74, %v73
  %v85 = vpack.c.b16 %v76, %v75
  %v86 = vpack.c.b16 %v78, %v77
  %95 = vmatprep.subr.bf16.mxu0 0
  %96 = vmatpush1.bf16.msra.mxu0 %v79
  %97 = vmatprep.subr.bf16.mxu0 0
  %98 = vmatpush1.bf16.msra.mxu0 %v80
  %99 = vmatprep.subr.bf16.mxu0 0
  %100 = vmatpush1.bf16.msra.mxu0 %v81
  %101 = vmatprep.subr.bf16.mxu0 0
  %102 = vmatpush1.bf16.msra.mxu0 %v82
  %103 = vmatprep.subr.bf16.mxu0 0
  %104 = vmatpush1.bf16.msra.mxu0 %v83
  %105 = vmatprep.subr.bf16.mxu0 0
  %106 = vmatpush1.bf16.msra.mxu0 %v84
  %107 = vmatprep.subr.bf16.mxu0 0
  %108 = vmatpush1.bf16.msra.mxu0 %v85
  %109 = vmatprep.subr.bf16.mxu0 0
  %110 = vmatpush1.bf16.msra.mxu0 %v86
  %111 = vmatprep.subr.bf16.mxu0 0
  %112 = vmatpush1.bf16.msra.mxu0 0
  %113 = vmatprep.subr.bf16.mxu0 0
  %114 = vmatpush1.bf16.msra.mxu0 0
  %115 = vmatprep.subr.bf16.mxu0 0
  %116 = vmatpush1.bf16.msra.mxu0 0
  %117 = vmatprep.subr.bf16.mxu0 0
  %118 = vmatpush1.bf16.msra.mxu0 0
  %119 = vmatprep.subr.bf16.mxu0 0
  %120 = vmatpush1.bf16.msra.mxu0 0
  %121 = vmatprep.subr.bf16.mxu0 0
  %122 = vmatpush1.bf16.msra.mxu0 0
  %123 = vmatprep.subr.bf16.mxu0 0
  %124 = vmatpush1.bf16.msra.mxu0 0
  %125 = vmatprep.subr.bf16.mxu0 0
  %126 = vmatpush1.bf16.msra.mxu0 0
  %127 = vmatprep.mubr.bf16.mxu0 0
  %128 = vmatmul.mubr.bf16.gmra.mrb[0].mxu0 %v45
  %v129 = vpop.f32.mrb[0].mxu0
  %v130 = vadd.f32 0.0, %v129
  %v131 = vpop.f32.mrb[0].mxu0
  %v132 = vpop.f32.mrb[0].mxu0
  %v133 = vadd.f32 0.0, %v132
  %v134 = vpop.f32.mrb[0].mxu0
  %135 = vdwg.mxu0
  %v136 = vadd.f32 %v21, %v130
  %v137 = vadd.f32 %v22, %v133
  %138 = vst [vmem:[#allocation2] sm:$0xff] %v136
  %139 = vst [vmem:[#allocation2 + $0x8] sm:$0xff] %v137
  // Predicated region
  $region18: #{_linear_2d.1} parent=0 // pred_check
    %p140 = pneg %p15
  $region19: #{_linear_2d.1} parent=0 // pred_check_branch
    %142 = sbr.rel (%p140) target = $region21
  $region20: #{_linear_2d.1} parent=0 // pred_region
    %v143 = vld [vmem:[#allocation2] sm:$0xff]
    %v144 = vld [vmem:[#allocation2 + $0x8] sm:$0xff]
    %v145 = vld [vmem:[%s2] sm:$0x1]
    %v147 = vlaneseq
    %v148 = vshrl.u32 %v147, 7
    %v149 = vsub.s32 0, %v148
    %v150 = vrot.slane %v145, %v149
    %v152 = vadd.f32 %v143, %v150
    %v153 = vadd.f32 %v144, %v150
    %154 = vst [vmem:[%s3] sm:$0xff] %v152
    %155 = vst [vmem:[%s3 + $0x8] sm:$0xff] %v153
  $region21: #{_linear_2d.1} parent=0 // pred_fallthru
    _
  // Predicated region
  $region22: #{_linear_2d.1} parent=0 // pred_check
    _
  $region23: #{_linear_2d.1} parent=0 // pred_check_branch
    %157 = sbr.rel (0) target = $region25
  $region24: #{_linear_2d.1} parent=0 // pred_region
    _
  $region25: #{_linear_2d.1} parent=0 // pred_fallthru
    _
  // Predicated region
  $region26: #{_linear_2d.1} parent=0 // pred_check
    _
  $region27: #{_linear_2d.1} parent=0 // pred_check_branch
    %159 = sbr.rel (0) target = $region29
  $region28: #{_linear_2d.1} parent=0 // pred_region
    _
  $region29: #{_linear_2d.1} parent=0 // pred_fallthru
    _

</llo_original>
